<compile_context>
chip_gen: v5e
topology: v5e:2x2
jax: 0.10.0
libtpu: 0.0.40
codegen_flags: <defaults>
</compile_context>

<pallas_src>
import jax
import jax.numpy as jnp
import numpy as np
from jax.experimental import pallas as pl
from jax.experimental.pallas import tpu as pltpu


def _round_up(x, m):
    return (x + m - 1) // m * m


def _make_basic_block_kernel(H, W, C, CP, PAD):
    """Fused BasicBlock body for one image in (C, H*W) lane-major layout."""
    HW = H * W
    # flat-index shift of each 3x3 tap (dh, dw); row stride is W
    SHIFTS = [(dh - 1) * W + (dw - 1) for dh in range(3) for dw in range(3)]

    def kernel(x_ref, mask_ref, w1_ref, s1_ref, b1_ref, w2_ref, s2_ref, b2_ref,
               out_ref, xpad_ref, col_ref):
        # Hoisted once: column-edge masks for left / right taps, (1, HW).
        m_left = mask_ref[0:1, :]     # zero where w == 0
        m_right = mask_ref[1:2, :]    # zero where w == W-1

        # In-kernel halo: zero the padded flat plane once; interior is
        # overwritten below (pad regions stay zero for both convs).
        xpad_ref[...] = jnp.zeros_like(xpad_ref)

        def conv3x3(w_t):
            """im2col into col_ref, then one (CP, 9C) @ (9C, HW) MXU matmul."""
            for t, s in enumerate(SHIFTS):
                shifted = xpad_ref[:, PAD + s:PAD + s + HW]        # (C, HW)
                dw = t % 3
                if dw == 0:
                    shifted = shifted * m_left
                elif dw == 2:
                    shifted = shifted * m_right
                col_ref[t * C:(t + 1) * C, :] = shifted
            out = jnp.dot(w_t, col_ref[...],
                          preferred_element_type=jnp.float32)      # (CP, HW)
            return out[:C, :]                                      # (C, HW)

        x2d = x_ref[0].astype(jnp.float32)                         # (C, HW)

        # ---- conv1 + BN1 + ReLU (intermediate stays in VMEM) ----
        xpad_ref[:, PAD:PAD + HW] = x2d
        y = conv3x3(w1_ref[...])
        y = jnp.maximum(y * s1_ref[...] + b1_ref[...], 0.0)

        # ---- conv2 + BN2 + identity residual + ReLU ----
        xpad_ref[:, PAD:PAD + HW] = y
        z = conv3x3(w2_ref[...])
        z = z * s2_ref[...] + b2_ref[...] + x2d
        out_ref[0] = jnp.maximum(z, 0.0).astype(out_ref.dtype)

    return kernel


def basic_block_forward(x_nchw, params):
    """Matches BasicBlock.forward with stride=1, downsample=None (NCHW in/out)."""
    N, Cin, H, W = x_nchw.shape
    HW = H * W
    w1, w2 = params["w1"], params["w2"]          # HWIO: (3, 3, Cin, C)
    C = w1.shape[-1]
    if Cin != C:
        raise NotImplementedError("identity shortcut requires inplanes == planes")

    CP = _round_up(C, 8)                 # pad matmul M-dim to a full sublane group
    PAD = _round_up(W + 1, 128)          # flat halo; keeps interior store 128-aligned

    # channel-major, spatially flattened (lane-dense) activations: (N, C, H*W)
    x_flat = x_nchw.reshape(N, C, HW).astype(jnp.float32)

    def prep_w(w):                       # (3,3,Ci,Co) -> (CP, 9*Ci), zero row-padded
        wt = jnp.asarray(w, jnp.float32).reshape(9 * C, C).T      # (C, 9C)
        return jnp.pad(wt, ((0, CP - C), (0, 0)))
    w1_t, w2_t = prep_w(w1), prep_w(w2)

    s1 = jnp.asarray(params["scale1"], jnp.float32).reshape(C, 1)
    b1 = jnp.asarray(params["bias1"], jnp.float32).reshape(C, 1)
    s2 = jnp.asarray(params["scale2"], jnp.float32).reshape(C, 1)
    b2 = jnp.asarray(params["bias2"], jnp.float32).reshape(C, 1)

    # static column-edge masks (built host-side; no in-kernel iota/mod needed)
    wi = np.arange(HW) % W
    masks = jnp.asarray(
        np.stack([wi >= 1, wi <= W - 2], axis=0).astype(np.float32))   # (2, HW)

    kernel = _make_basic_block_kernel(H, W, C, CP, PAD)

    per_image = lambda n: (n, 0, 0)
    shared = lambda n: (0, 0)

    out_flat = pl.pallas_call(
        kernel,
        out_shape=jax.ShapeDtypeStruct((N, C, HW), jnp.float32),
        grid_spec=pltpu.PrefetchScalarGridSpec(
            num_scalar_prefetch=0,
            grid=(N,),                                   # 2 parallel steps -> both v7x TCs
            in_specs=[
                pl.BlockSpec((1, C, HW), per_image),     # x (lane-dense)
                pl.BlockSpec((2, HW), shared),           # edge masks
                pl.BlockSpec((CP, 9 * C), shared),       # w1 (Cout-major, padded)
                pl.BlockSpec((C, 1), shared),            # scale1
                pl.BlockSpec((C, 1), shared),            # bias1
                pl.BlockSpec((CP, 9 * C), shared),       # w2
                pl.BlockSpec((C, 1), shared),            # scale2
                pl.BlockSpec((C, 1), shared),            # bias2
            ],
            out_specs=pl.BlockSpec((1, C, HW), per_image),
            scratch_shapes=[
                pltpu.VMEM((C, HW + 2 * PAD), jnp.float32),   # zero-padded flat plane
                pltpu.VMEM((9 * C, HW), jnp.float32),         # im2col buffer
            ],
        ),
        compiler_params=pltpu.CompilerParams(
            dimension_semantics=("parallel",)),
    )(x_flat, masks, w1_t, s1, b1, w2_t, s2, b2)

    return out_flat.reshape(N, C, H, W)


# ---------------- pure-JAX reference (for correctness check) ----------------
def _ref_conv_bn_relu(x, w, scale, bias, residual=None):
    y = jax.lax.conv_general_dilated(
        x, w, window_strides=(1, 1), padding=((1, 1), (1, 1)),
        dimension_numbers=("NHWC", "HWIO", "NHWC"))
    y = y * scale.reshape(1, 1, 1, -1) + bias.reshape(1, 1, 1, -1)
    if residual is not None:
        y = y + residual
    return jnp.maximum(y, 0.0)


if __name__ == "__main__":
    key = jax.random.PRNGKey(0)
    ks = jax.random.split(key, 12)

    # BasicBlock(inplanes=4, planes=4, stride=1, downsample=None)
    N, C, H, W = 2, 4, 16, 16
    eps = 1e-5

    x = jax.random.normal(ks[0], (N, C, H, W), jnp.float32)

    # conv weights in HWIO (equivalent to torch OIHW transposed)
    w1 = 0.1 * jax.random.normal(ks[1], (3, 3, C, C), jnp.float32)
    w2 = 0.1 * jax.random.normal(ks[2], (3, 3, C, C), jnp.float32)

    # BatchNorm params (eval-mode, folded into scale/bias)
    g1 = 1.0 + 0.1 * jax.random.normal(ks[3], (C,), jnp.float32)
    b1 = 0.1 * jax.random.normal(ks[4], (C,), jnp.float32)
    m1 = 0.1 * jax.random.normal(ks[5], (C,), jnp.float32)
    v1 = 1.0 + 0.1 * jnp.abs(jax.random.normal(ks[6], (C,), jnp.float32))
    g2 = 1.0 + 0.1 * jax.random.normal(ks[7], (C,), jnp.float32)
    b2 = 0.1 * jax.random.normal(ks[8], (C,), jnp.float32)
    m2 = 0.1 * jax.random.normal(ks[9], (C,), jnp.float32)
    v2 = 1.0 + 0.1 * jnp.abs(jax.random.normal(ks[10], (C,), jnp.float32))

    scale1 = g1 / jnp.sqrt(v1 + eps)
    bias1 = b1 - m1 * scale1
    scale2 = g2 / jnp.sqrt(v2 + eps)
    bias2 = b2 - m2 * scale2

    params = dict(w1=w1, scale1=scale1, bias1=bias1,
                  w2=w2, scale2=scale2, bias2=bias2)

    out = jax.block_until_ready(basic_block_forward(x, params))

    # reference (NHWC lax conv)
    xh = jnp.transpose(x, (0, 2, 3, 1))
    r = _ref_conv_bn_relu(xh, w1, scale1, bias1)
    r = _ref_conv_bn_relu(r, w2, scale2, bias2, residual=xh)
    ref = jnp.transpose(r, (0, 3, 1, 2))

    np.testing.assert_allclose(np.asarray(out), np.asarray(ref),
                               rtol=1e-4, atol=1e-4)
    print("KERNEL_OK")
</pallas_src>

<mosaic_0001>
module attributes {stable_mosaic.version = 11 : i64} {
  func.func @kernel(%arg0: i32, %arg1: memref<1x4x256xf32, #tpu.memory_space<vmem>>, %arg2: memref<2x256xf32, #tpu.memory_space<vmem>>, %arg3: memref<8x36xf32, #tpu.memory_space<vmem>>, %arg4: memref<4x1xf32, #tpu.memory_space<vmem>>, %arg5: memref<4x1xf32, #tpu.memory_space<vmem>>, %arg6: memref<8x36xf32, #tpu.memory_space<vmem>>, %arg7: memref<4x1xf32, #tpu.memory_space<vmem>>, %arg8: memref<4x1xf32, #tpu.memory_space<vmem>>, %arg9: memref<1x4x256xf32, #tpu.memory_space<vmem>>, %arg10: memref<4x512xf32, #tpu.memory_space<vmem>>, %arg11: memref<36x256xf32, #tpu.memory_space<vmem>>) attributes {dimension_semantics = [#tpu.dimension_semantics<parallel>], iteration_bounds = array<i64: 2>, scalar_prefetch = 0 : i64, scratch_operands = 2 : i64, tpu.core_type = #tpu.core_type<tc>, window_params = [{transform_indices = @transform_0, window_bounds = array<i64: 1, 4, 256>}, {pipeline_mode = #tpu.pipeline_mode<synchronous>, transform_indices = @transform_1, window_bounds = array<i64: 2, 256>}, {pipeline_mode = #tpu.pipeline_mode<synchronous>, transform_indices = @transform_2, window_bounds = array<i64: 8, 36>}, {pipeline_mode = #tpu.pipeline_mode<synchronous>, transform_indices = @transform_3, window_bounds = array<i64: 4, 1>}, {pipeline_mode = #tpu.pipeline_mode<synchronous>, transform_indices = @transform_4, window_bounds = array<i64: 4, 1>}, {pipeline_mode = #tpu.pipeline_mode<synchronous>, transform_indices = @transform_5, window_bounds = array<i64: 8, 36>}, {pipeline_mode = #tpu.pipeline_mode<synchronous>, transform_indices = @transform_6, window_bounds = array<i64: 4, 1>}, {pipeline_mode = #tpu.pipeline_mode<synchronous>, transform_indices = @transform_7, window_bounds = array<i64: 4, 1>}, {transform_indices = @transform_8, window_bounds = array<i64: 1, 4, 256>}]} {
    %c0 = arith.constant 0 : index
    %c0_0 = arith.constant 0 : index
    %0 = vector.load %arg2[%c0, %c0_0] : memref<2x256xf32, #tpu.memory_space<vmem>>, vector<1x256xf32>
    %c1 = arith.constant 1 : index
    %c0_1 = arith.constant 0 : index
    %1 = vector.load %arg2[%c1, %c0_1] : memref<2x256xf32, #tpu.memory_space<vmem>>, vector<1x256xf32>
    %cst = arith.constant 0.000000e+00 : f32
    %2 = vector.broadcast %cst : f32 to vector<4x512xf32>
    %c0_2 = arith.constant 0 : index
    %c0_3 = arith.constant 0 : index
    %3 = vector.load %arg10[%c0_2, %c0_3] : memref<4x512xf32, #tpu.memory_space<vmem>>, vector<4x512xf32>
    tpu.vector_store %arg10[%c0_2, %c0_3], %2 {strides = array<i32>} : memref<4x512xf32, #tpu.memory_space<vmem>>, vector<4x512xf32>,
    %c0_4 = arith.constant 0 : index
    %c0_5 = arith.constant 0 : index
    %c0_6 = arith.constant 0 : index
    %4 = vector.load %arg1[%c0_4, %c0_5, %c0_6] : memref<1x4x256xf32, #tpu.memory_space<vmem>>, vector<1x4x256xf32>
    %5 = vector.shape_cast %4 : vector<1x4x256xf32> to vector<4x256xf32>
    %c0_7 = arith.constant 0 : index
    %c128 = arith.constant 128 : index
    %6 = vector.load %arg10[%c0_7, %c128] : memref<4x512xf32, #tpu.memory_space<vmem>>, vector<4x256xf32>
    tpu.vector_store %arg10[%c0_7, %c128], %5 {strides = array<i32>} : memref<4x512xf32, #tpu.memory_space<vmem>>, vector<4x256xf32>,
    %c0_8 = arith.constant 0 : index
    %c0_9 = arith.constant 0 : index
    %7 = vector.load %arg3[%c0_8, %c0_9] : memref<8x36xf32, #tpu.memory_space<vmem>>, vector<8x36xf32>
    %c0_10 = arith.constant 0 : index
    %c111 = arith.constant 111 : index
    %8 = vector.load %arg10[%c0_10, %c111] : memref<4x512xf32, #tpu.memory_space<vmem>>, vector<4x256xf32>
    %9 = vector.broadcast %0 : vector<1x256xf32> to vector<4x256xf32>
    %10 = arith.mulf %8, %9 : vector<4x256xf32>
    %c0_11 = arith.constant 0 : index
    %c0_12 = arith.constant 0 : index
    %11 = vector.load %arg11[%c0_11, %c0_12] : memref<36x256xf32, #tpu.memory_space<vmem>>, vector<4x256xf32>
    tpu.vector_store %arg11[%c0_11, %c0_12], %10 {strides = array<i32>} : memref<36x256xf32, #tpu.memory_space<vmem>>, vector<4x256xf32>,
    %c0_13 = arith.constant 0 : index
    %c112 = arith.constant 112 : index
    %12 = vector.load %arg10[%c0_13, %c112] : memref<4x512xf32, #tpu.memory_space<vmem>>, vector<4x256xf32>
    %c4 = arith.constant 4 : index
    %c0_14 = arith.constant 0 : index
    %13 = vector.load %arg11[%c4, %c0_14] : memref<36x256xf32, #tpu.memory_space<vmem>>, vector<4x256xf32>
    tpu.vector_store %arg11[%c4, %c0_14], %12 {strides = array<i32>} : memref<36x256xf32, #tpu.memory_space<vmem>>, vector<4x256xf32>,
    %c0_15 = arith.constant 0 : index
    %c113 = arith.constant 113 : index
    %14 = vector.load %arg10[%c0_15, %c113] : memref<4x512xf32, #tpu.memory_space<vmem>>, vector<4x256xf32>
    %15 = vector.broadcast %1 : vector<1x256xf32> to vector<4x256xf32>
    %16 = arith.mulf %14, %15 : vector<4x256xf32>
    %c8 = arith.constant 8 : index
    %c0_16 = arith.constant 0 : index
    %17 = vector.load %arg11[%c8, %c0_16] : memref<36x256xf32, #tpu.memory_space<vmem>>, vector<4x256xf32>
    tpu.vector_store %arg11[%c8, %c0_16], %16 {strides = array<i32>} : memref<36x256xf32, #tpu.memory_space<vmem>>, vector<4x256xf32>,
    %c0_17 = arith.constant 0 : index
    %c127 = arith.constant 127 : index
    %18 = vector.load %arg10[%c0_17, %c127] : memref<4x512xf32, #tpu.memory_space<vmem>>, vector<4x256xf32>
    %19 = vector.broadcast %0 : vector<1x256xf32> to vector<4x256xf32>
    %20 = arith.mulf %18, %19 : vector<4x256xf32>
    %c12 = arith.constant 12 : index
    %c0_18 = arith.constant 0 : index
    %21 = vector.load %arg11[%c12, %c0_18] : memref<36x256xf32, #tpu.memory_space<vmem>>, vector<4x256xf32>
    tpu.vector_store %arg11[%c12, %c0_18], %20 {strides = array<i32>} : memref<36x256xf32, #tpu.memory_space<vmem>>, vector<4x256xf32>,
    %c0_19 = arith.constant 0 : index
    %c128_20 = arith.constant 128 : index
    %22 = vector.load %arg10[%c0_19, %c128_20] : memref<4x512xf32, #tpu.memory_space<vmem>>, vector<4x256xf32>
    %c16 = arith.constant 16 : index
    %c0_21 = arith.constant 0 : index
    %23 = vector.load %arg11[%c16, %c0_21] : memref<36x256xf32, #tpu.memory_space<vmem>>, vector<4x256xf32>
    tpu.vector_store %arg11[%c16, %c0_21], %22 {strides = array<i32>} : memref<36x256xf32, #tpu.memory_space<vmem>>, vector<4x256xf32>,
    %c0_22 = arith.constant 0 : index
    %c129 = arith.constant 129 : index
    %24 = vector.load %arg10[%c0_22, %c129] : memref<4x512xf32, #tpu.memory_space<vmem>>, vector<4x256xf32>
    %25 = vector.broadcast %1 : vector<1x256xf32> to vector<4x256xf32>
    %26 = arith.mulf %24, %25 : vector<4x256xf32>
    %c20 = arith.constant 20 : index
    %c0_23 = arith.constant 0 : index
    %27 = vector.load %arg11[%c20, %c0_23] : memref<36x256xf32, #tpu.memory_space<vmem>>, vector<4x256xf32>
    tpu.vector_store %arg11[%c20, %c0_23], %26 {strides = array<i32>} : memref<36x256xf32, #tpu.memory_space<vmem>>, vector<4x256xf32>,
    %c0_24 = arith.constant 0 : index
    %c143 = arith.constant 143 : index
    %28 = vector.load %arg10[%c0_24, %c143] : memref<4x512xf32, #tpu.memory_space<vmem>>, vector<4x256xf32>
    %29 = vector.broadcast %0 : vector<1x256xf32> to vector<4x256xf32>
    %30 = arith.mulf %28, %29 : vector<4x256xf32>
    %c24 = arith.constant 24 : index
    %c0_25 = arith.constant 0 : index
    %31 = vector.load %arg11[%c24, %c0_25] : memref<36x256xf32, #tpu.memory_space<vmem>>, vector<4x256xf32>
    tpu.vector_store %arg11[%c24, %c0_25], %30 {strides = array<i32>} : memref<36x256xf32, #tpu.memory_space<vmem>>, vector<4x256xf32>,
    %c0_26 = arith.constant 0 : index
    %c144 = arith.constant 144 : index
    %32 = vector.load %arg10[%c0_26, %c144] : memref<4x512xf32, #tpu.memory_space<vmem>>, vector<4x256xf32>
    %c28 = arith.constant 28 : index
    %c0_27 = arith.constant 0 : index
    %33 = vector.load %arg11[%c28, %c0_27] : memref<36x256xf32, #tpu.memory_space<vmem>>, vector<4x256xf32>
    tpu.vector_store %arg11[%c28, %c0_27], %32 {strides = array<i32>} : memref<36x256xf32, #tpu.memory_space<vmem>>, vector<4x256xf32>,
    %c0_28 = arith.constant 0 : index
    %c145 = arith.constant 145 : index
    %34 = vector.load %arg10[%c0_28, %c145] : memref<4x512xf32, #tpu.memory_space<vmem>>, vector<4x256xf32>
    %35 = vector.broadcast %1 : vector<1x256xf32> to vector<4x256xf32>
    %36 = arith.mulf %34, %35 : vector<4x256xf32>
    %c32 = arith.constant 32 : index
    %c0_29 = arith.constant 0 : index
    %37 = vector.load %arg11[%c32, %c0_29] : memref<36x256xf32, #tpu.memory_space<vmem>>, vector<4x256xf32>
    tpu.vector_store %arg11[%c32, %c0_29], %36 {strides = array<i32>} : memref<36x256xf32, #tpu.memory_space<vmem>>, vector<4x256xf32>,
    %c0_30 = arith.constant 0 : index
    %c0_31 = arith.constant 0 : index
    %38 = vector.load %arg11[%c0_30, %c0_31] : memref<36x256xf32, #tpu.memory_space<vmem>>, vector<36x256xf32>
    %cst_32 = arith.constant dense<0.000000e+00> : vector<8x256xf32>
    %39 = tpu.matmul %7, %38, %cst_32 {dimension_numbers = #tpu.dot_dimension_numbers<[1], [0], [0], [1], [0, 0, 1, 1], [], []>} : vector<8x36xf32>, vector<36x256xf32>, vector<8x256xf32> -> vector<8x256xf32>
    %40 = vector.extract_strided_slice %39 {offsets = [0, 0], sizes = [4, 256], strides = [1, 1]} : vector<8x256xf32> to vector<4x256xf32>
    %c0_33 = arith.constant 0 : index
    %c0_34 = arith.constant 0 : index
    %41 = vector.load %arg4[%c0_33, %c0_34] : memref<4x1xf32, #tpu.memory_space<vmem>>, vector<4x1xf32>
    %42 = vector.broadcast %41 : vector<4x1xf32> to vector<4x256xf32>
    %43 = arith.mulf %40, %42 : vector<4x256xf32>
    %c0_35 = arith.constant 0 : index
    %c0_36 = arith.constant 0 : index
    %44 = vector.load %arg5[%c0_35, %c0_36] : memref<4x1xf32, #tpu.memory_space<vmem>>, vector<4x1xf32>
    %45 = vector.broadcast %44 : vector<4x1xf32> to vector<4x256xf32>
    %46 = arith.addf %43, %45 : vector<4x256xf32>
    %cst_37 = arith.constant 0.000000e+00 : f32
    %47 = vector.broadcast %cst_37 : f32 to vector<4x256xf32>
    %48 = arith.maximumf %46, %47 : vector<4x256xf32>
    %c0_38 = arith.constant 0 : index
    %c128_39 = arith.constant 128 : index
    %49 = vector.load %arg10[%c0_38, %c128_39] : memref<4x512xf32, #tpu.memory_space<vmem>>, vector<4x256xf32>
    tpu.vector_store %arg10[%c0_38, %c128_39], %48 {strides = array<i32>} : memref<4x512xf32, #tpu.memory_space<vmem>>, vector<4x256xf32>,
    %c0_40 = arith.constant 0 : index
    %c0_41 = arith.constant 0 : index
    %50 = vector.load %arg6[%c0_40, %c0_41] : memref<8x36xf32, #tpu.memory_space<vmem>>, vector<8x36xf32>
    %c0_42 = arith.constant 0 : index
    %c111_43 = arith.constant 111 : index
    %51 = vector.load %arg10[%c0_42, %c111_43] : memref<4x512xf32, #tpu.memory_space<vmem>>, vector<4x256xf32>
    %52 = vector.broadcast %0 : vector<1x256xf32> to vector<4x256xf32>
    %53 = arith.mulf %51, %52 : vector<4x256xf32>
    %c0_44 = arith.constant 0 : index
    %c0_45 = arith.constant 0 : index
    %54 = vector.load %arg11[%c0_44, %c0_45] : memref<36x256xf32, #tpu.memory_space<vmem>>, vector<4x256xf32>
    tpu.vector_store %arg11[%c0_44, %c0_45], %53 {strides = array<i32>} : memref<36x256xf32, #tpu.memory_space<vmem>>, vector<4x256xf32>,
    %c0_46 = arith.constant 0 : index
    %c112_47 = arith.constant 112 : index
    %55 = vector.load %arg10[%c0_46, %c112_47] : memref<4x512xf32, #tpu.memory_space<vmem>>, vector<4x256xf32>
    %c4_48 = arith.constant 4 : index
    %c0_49 = arith.constant 0 : index
    %56 = vector.load %arg11[%c4_48, %c0_49] : memref<36x256xf32, #tpu.memory_space<vmem>>, vector<4x256xf32>
    tpu.vector_store %arg11[%c4_48, %c0_49], %55 {strides = array<i32>} : memref<36x256xf32, #tpu.memory_space<vmem>>, vector<4x256xf32>,
    %c0_50 = arith.constant 0 : index
    %c113_51 = arith.constant 113 : index
    %57 = vector.load %arg10[%c0_50, %c113_51] : memref<4x512xf32, #tpu.memory_space<vmem>>, vector<4x256xf32>
    %58 = vector.broadcast %1 : vector<1x256xf32> to vector<4x256xf32>
    %59 = arith.mulf %57, %58 : vector<4x256xf32>
    %c8_52 = arith.constant 8 : index
    %c0_53 = arith.constant 0 : index
    %60 = vector.load %arg11[%c8_52, %c0_53] : memref<36x256xf32, #tpu.memory_space<vmem>>, vector<4x256xf32>
    tpu.vector_store %arg11[%c8_52, %c0_53], %59 {strides = array<i32>} : memref<36x256xf32, #tpu.memory_space<vmem>>, vector<4x256xf32>,
    %c0_54 = arith.constant 0 : index
    %c127_55 = arith.constant 127 : index
    %61 = vector.load %arg10[%c0_54, %c127_55] : memref<4x512xf32, #tpu.memory_space<vmem>>, vector<4x256xf32>
    %62 = vector.broadcast %0 : vector<1x256xf32> to vector<4x256xf32>
    %63 = arith.mulf %61, %62 : vector<4x256xf32>
    %c12_56 = arith.constant 12 : index
    %c0_57 = arith.constant 0 : index
    %64 = vector.load %arg11[%c12_56, %c0_57] : memref<36x256xf32, #tpu.memory_space<vmem>>, vector<4x256xf32>
    tpu.vector_store %arg11[%c12_56, %c0_57], %63 {strides = array<i32>} : memref<36x256xf32, #tpu.memory_space<vmem>>, vector<4x256xf32>,
    %c0_58 = arith.constant 0 : index
    %c128_59 = arith.constant 128 : index
    %65 = vector.load %arg10[%c0_58, %c128_59] : memref<4x512xf32, #tpu.memory_space<vmem>>, vector<4x256xf32>
    %c16_60 = arith.constant 16 : index
    %c0_61 = arith.constant 0 : index
    %66 = vector.load %arg11[%c16_60, %c0_61] : memref<36x256xf32, #tpu.memory_space<vmem>>, vector<4x256xf32>
    tpu.vector_store %arg11[%c16_60, %c0_61], %65 {strides = array<i32>} : memref<36x256xf32, #tpu.memory_space<vmem>>, vector<4x256xf32>,
    %c0_62 = arith.constant 0 : index
    %c129_63 = arith.constant 129 : index
    %67 = vector.load %arg10[%c0_62, %c129_63] : memref<4x512xf32, #tpu.memory_space<vmem>>, vector<4x256xf32>
    %68 = vector.broadcast %1 : vector<1x256xf32> to vector<4x256xf32>
    %69 = arith.mulf %67, %68 : vector<4x256xf32>
    %c20_64 = arith.constant 20 : index
    %c0_65 = arith.constant 0 : index
    %70 = vector.load %arg11[%c20_64, %c0_65] : memref<36x256xf32, #tpu.memory_space<vmem>>, vector<4x256xf32>
    tpu.vector_store %arg11[%c20_64, %c0_65], %69 {strides = array<i32>} : memref<36x256xf32, #tpu.memory_space<vmem>>, vector<4x256xf32>,
    %c0_66 = arith.constant 0 : index
    %c143_67 = arith.constant 143 : index
    %71 = vector.load %arg10[%c0_66, %c143_67] : memref<4x512xf32, #tpu.memory_space<vmem>>, vector<4x256xf32>
    %72 = vector.broadcast %0 : vector<1x256xf32> to vector<4x256xf32>
    %73 = arith.mulf %71, %72 : vector<4x256xf32>
    %c24_68 = arith.constant 24 : index
    %c0_69 = arith.constant 0 : index
    %74 = vector.load %arg11[%c24_68, %c0_69] : memref<36x256xf32, #tpu.memory_space<vmem>>, vector<4x256xf32>
    tpu.vector_store %arg11[%c24_68, %c0_69], %73 {strides = array<i32>} : memref<36x256xf32, #tpu.memory_space<vmem>>, vector<4x256xf32>,
    %c0_70 = arith.constant 0 : index
    %c144_71 = arith.constant 144 : index
    %75 = vector.load %arg10[%c0_70, %c144_71] : memref<4x512xf32, #tpu.memory_space<vmem>>, vector<4x256xf32>
    %c28_72 = arith.constant 28 : index
    %c0_73 = arith.constant 0 : index
    %76 = vector.load %arg11[%c28_72, %c0_73] : memref<36x256xf32, #tpu.memory_space<vmem>>, vector<4x256xf32>
    tpu.vector_store %arg11[%c28_72, %c0_73], %75 {strides = array<i32>} : memref<36x256xf32, #tpu.memory_space<vmem>>, vector<4x256xf32>,
    %c0_74 = arith.constant 0 : index
    %c145_75 = arith.constant 145 : index
    %77 = vector.load %arg10[%c0_74, %c145_75] : memref<4x512xf32, #tpu.memory_space<vmem>>, vector<4x256xf32>
    %78 = vector.broadcast %1 : vector<1x256xf32> to vector<4x256xf32>
    %79 = arith.mulf %77, %78 : vector<4x256xf32>
    %c32_76 = arith.constant 32 : index
    %c0_77 = arith.constant 0 : index
    %80 = vector.load %arg11[%c32_76, %c0_77] : memref<36x256xf32, #tpu.memory_space<vmem>>, vector<4x256xf32>
    tpu.vector_store %arg11[%c32_76, %c0_77], %79 {strides = array<i32>} : memref<36x256xf32, #tpu.memory_space<vmem>>, vector<4x256xf32>,
    %c0_78 = arith.constant 0 : index
    %c0_79 = arith.constant 0 : index
    %81 = vector.load %arg11[%c0_78, %c0_79] : memref<36x256xf32, #tpu.memory_space<vmem>>, vector<36x256xf32>
    %cst_80 = arith.constant dense<0.000000e+00> : vector<8x256xf32>
    %82 = tpu.matmul %50, %81, %cst_80 {dimension_numbers = #tpu.dot_dimension_numbers<[1], [0], [0], [1], [0, 0, 1, 1], [], []>} : vector<8x36xf32>, vector<36x256xf32>, vector<8x256xf32> -> vector<8x256xf32>
    %83 = vector.extract_strided_slice %82 {offsets = [0, 0], sizes = [4, 256], strides = [1, 1]} : vector<8x256xf32> to vector<4x256xf32>
    %c0_81 = arith.constant 0 : index
    %c0_82 = arith.constant 0 : index
    %84 = vector.load %arg7[%c0_81, %c0_82] : memref<4x1xf32, #tpu.memory_space<vmem>>, vector<4x1xf32>
    %85 = vector.broadcast %84 : vector<4x1xf32> to vector<4x256xf32>
    %86 = arith.mulf %83, %85 : vector<4x256xf32>
    %c0_83 = arith.constant 0 : index
    %c0_84 = arith.constant 0 : index
    %87 = vector.load %arg8[%c0_83, %c0_84] : memref<4x1xf32, #tpu.memory_space<vmem>>, vector<4x1xf32>
    %88 = vector.broadcast %87 : vector<4x1xf32> to vector<4x256xf32>
    %89 = arith.addf %86, %88 : vector<4x256xf32>
    %90 = arith.addf %89, %5 : vector<4x256xf32>
    %cst_85 = arith.constant 0.000000e+00 : f32
    %91 = vector.broadcast %cst_85 : f32 to vector<4x256xf32>
    %92 = arith.maximumf %90, %91 : vector<4x256xf32>
    %c0_86 = arith.constant 0 : index
    %c0_87 = arith.constant 0 : index
    %c0_88 = arith.constant 0 : index
    %93 = vector.load %arg9[%c0_86, %c0_87, %c0_88] : memref<1x4x256xf32, #tpu.memory_space<vmem>>, vector<1x4x256xf32>
    %94 = vector.shape_cast %93 : vector<1x4x256xf32> to vector<4x256xf32>
    %95 = vector.shape_cast %92 : vector<4x256xf32> to vector<1x4x256xf32>
    tpu.vector_store %arg9[%c0_86, %c0_87, %c0_88], %95 {strides = array<i32>} : memref<1x4x256xf32, #tpu.memory_space<vmem>>, vector<1x4x256xf32>,
    return
  }
  func.func @transform_0(%arg0: i32) -> (i32, i32, i32) {
    %c0_i32 = arith.constant 0 : i32
    %c0_i32_0 = arith.constant 0 : i32
    %c0_i32_1 = arith.constant 0 : i32
    return %arg0, %c0_i32, %c0_i32_0 : i32, i32, i32
  }
  func.func @transform_1(%arg0: i32) -> (i32, i32) {
    %c0_i32 = arith.constant 0 : i32
    %c0_i32_0 = arith.constant 0 : i32
    %c0_i32_1 = arith.constant 0 : i32
    return %c0_i32, %c0_i32_0 : i32, i32
  }
  func.func @transform_2(%arg0: i32) -> (i32, i32) {
    %c0_i32 = arith.constant 0 : i32
    %c0_i32_0 = arith.constant 0 : i32
    %c0_i32_1 = arith.constant 0 : i32
    return %c0_i32, %c0_i32_0 : i32, i32
  }
  func.func @transform_3(%arg0: i32) -> (i32, i32) {
    %c0_i32 = arith.constant 0 : i32
    %c0_i32_0 = arith.constant 0 : i32
    %c0_i32_1 = arith.constant 0 : i32
    return %c0_i32, %c0_i32_0 : i32, i32
  }
  func.func @transform_4(%arg0: i32) -> (i32, i32) {
    %c0_i32 = arith.constant 0 : i32
    %c0_i32_0 = arith.constant 0 : i32
    %c0_i32_1 = arith.constant 0 : i32
    return %c0_i32, %c0_i32_0 : i32, i32
  }
  func.func @transform_5(%arg0: i32) -> (i32, i32) {
    %c0_i32 = arith.constant 0 : i32
    %c0_i32_0 = arith.constant 0 : i32
    %c0_i32_1 = arith.constant 0 : i32
    return %c0_i32, %c0_i32_0 : i32, i32
  }
  func.func @transform_6(%arg0: i32) -> (i32, i32) {
    %c0_i32 = arith.constant 0 : i32
    %c0_i32_0 = arith.constant 0 : i32
    %c0_i32_1 = arith.constant 0 : i32
    return %c0_i32, %c0_i32_0 : i32, i32
  }
  func.func @transform_7(%arg0: i32) -> (i32, i32) {
    %c0_i32 = arith.constant 0 : i32
    %c0_i32_0 = arith.constant 0 : i32
    %c0_i32_1 = arith.constant 0 : i32
    return %c0_i32, %c0_i32_0 : i32, i32
  }
  func.func @transform_8(%arg0: i32) -> (i32, i32, i32) {
    %c0_i32 = arith.constant 0 : i32
    %c0_i32_0 = arith.constant 0 : i32
    %c0_i32_1 = arith.constant 0 : i32
    return %arg0, %c0_i32, %c0_i32_0 : i32, i32, i32
  }
}

</mosaic_0001>

<llo_original>
// kernel: tpu_custom_call.1
$region0: #{tpu_custom_call.1}
  #allocation0 [shape = 'u32[]', space=smem, size = 0x4, offset = 0x4, fixed_abs, tag = 'smem constant byte address 0x4 - core index']
  #allocation1 [shape = 'u32[72,128]{1,0:T(1,128)}', space=vmem, size = 0x9000, scoped, tag = 'internal scratch']
  #allocation2 [shape = 'f32[4,512]{1,0:T(4,128)}', space=vmem, size = 0x2000, scoped, tag = 'scratch operand']
  #allocation3 [shape = 'f32[36,256]{1,0:T(8,128)}', space=vmem, size = 0xa000, scoped, tag = 'scratch operand']
  %s0 = inlined_call_operand.hbm [shape: f32[2,4,256], index: 0, kind: input, shape index: {}]
  %s1 = inlined_call_operand.vmem [shape: f32[2,256], index: 1, kind: input, shape index: {}]
  %s2 = inlined_call_operand.vmem [shape: f32[8,36], index: 2, kind: input, shape index: {}]
  %s3 = inlined_call_operand.vmem [shape: f32[4,1], index: 3, kind: input, shape index: {}]
  %s4 = inlined_call_operand.vmem [shape: f32[4,1], index: 4, kind: input, shape index: {}]
  %s5 = inlined_call_operand.hbm [shape: f32[8,36], index: 5, kind: input, shape index: {}]
  %s6 = inlined_call_operand.vmem [shape: f32[4,1], index: 6, kind: input, shape index: {}]
  %s7 = inlined_call_operand.vmem [shape: f32[4,1], index: 7, kind: input, shape index: {}]
  %s8 = inlined_call_operand.hbm [shape: f32[2,4,256], index: 8, kind: output, shape index: {}]
  %s9 = sld [smem:[#allocation0]]
  $region73: #{tpu_custom_call.1} parent=0
    _
  %s11 = ssub.s32 1, %s9
  %s12 = scalar_select 0, %s11, %s9
  $region1: #{tpu_custom_call.1} parent=0
    #allocation4 [shape = 'u8[8192]{0}', space=vmem, size = 0x2000, scoped, tag = 'input window, operand 0']
    #allocation5 [shape = 's32[2]{0}', space=sflag, size = 0x8, scoped, tag = 'scoped memory for tpu_custom_call.1']
    #allocation6 [shape = 's32[2]{0}', space=sflag, size = 0x8, scoped, tag = 'scoped memory for tpu_custom_call.1']
    #allocation7 [shape = 'u8[4096]{0}', space=vmem, size = 0x1000, scoped, tag = 'input window, operand 5, single buffered']
    #allocation8 [shape = 's32[1]{0}', space=sflag, size = 0x4, scoped, tag = 'scoped memory for tpu_custom_call.1']
    #allocation9 [shape = 'u8[8192]{0}', space=vmem, size = 0x2000, scoped, tag = 'output window, operand 0']
    %13 = vsyncpa [#allocation5], 0
    %s14 = scalar_lea.sflag [#allocation5], 1
    %15 = vsyncpa %s14, 0
    %16 = vsyncpa [#allocation8], 0
    %17 = vsyncpa [#allocation6], 0
    %s18 = scalar_lea.sflag [#allocation6], 1
    %19 = vsyncpa %s18, 0
    loop: start=0, step=1, limit=4
    $region2: #{tpu_custom_call.1} parent=1 // loop_pre_header
      _
    $region3: #{tpu_custom_call.1} parent=1 // loop_header
      %s21 = sphi 0, %s25
      %p22 = scmp.ge.s32.totalorder %s21, 4
      %s31 = sphi 0, %s33
      %s34 = sphi 0, %s31
      %s35 = sphi 0, %s34
      %s51 = sphi 0, %s35
      %s55 = sphi 0, %s55
      %s57 = sphi 0, %s55
      %s58 = sphi 0, %s57
      %s72 = sphi 0, %s58
      %s76 = sphi 0, %s76
      %s78 = sphi 0, %s76
      %s79 = sphi 0, %s78
      %s93 = sphi 0, %s79
      %s97 = sphi 0, %s97
      %s99 = sphi 0, %s97
      %s100 = sphi 0, %s99
      %s114 = sphi 0, %s100
      %s118 = sphi 0, %s118
      %s120 = sphi 0, %s118
      %s121 = sphi 0, %s120
      %s135 = sphi 0, %s121
      %s139 = sphi 0, %s139
      %s141 = sphi 0, %s139
      %s142 = sphi 0, %s141
      %s156 = sphi 0, %s142
      %s160 = sphi 0, %s160
      %s162 = sphi 0, %s160
      %s163 = sphi 0, %s162
      %s177 = sphi 0, %s163
      %s181 = sphi 0, %s181
      %s183 = sphi 0, %s181
      %s184 = sphi 0, %s183
      %s198 = sphi 0, %s184
      %s204 = sphi 0, %s206
      %s207 = sphi 0, %s204
      %s208 = sphi 0, %s207
      %s224 = sphi 0, %s208
    $region4: #{tpu_custom_call.1} parent=1 // loop_header_branch
      %24 = sbr.rel (%p22) target = $region8
    $region5: #{tpu_custom_call.1} parent=1 // loop_body
      %s26 = ssub.s32 %s21, 1
      %s27 = ssub.s32 %s21, 2
      %s28 = sadd.s32 %s21, 1
      %s29 = ssub.s32 %s21, %s28
      %p30 = scmp.eq.s32.totalorder %s29, 0
      %s32 = sadd.s32 %s31, 1
      %s33 = scalar_select %p30, %s31, %s32
      %p36 = pneg %p30
      %p37 = scmp.eq.s32.totalorder %s21, 1
      %p38 = por %p36, %p37
      %p39 = scmp.ne.s32.totalorder %s31, %s34
      %p40 = scmp.eq.s32.totalorder %s21, 0
      %p41 = por %p39, %p40
      %p42 = scmp.ne.s32.totalorder %s31, %s34
      %p43 = scmp.eq.s32.totalorder %s26, 1
      %p44 = por %p42, %p43
      %p45 = scmp.ne.s32.totalorder %s34, %s35
      %p46 = scmp.eq.s32.totalorder %s26, 0
      %p47 = por %p45, %p46
      %p48 = scmp.ne.s32.totalorder %s34, %s35
      %p49 = scmp.eq.s32.totalorder %s27, 1
      %p50 = por %p48, %p49
      %p52 = scmp.ne.s32.totalorder %s35, %s51
      %p53 = scmp.eq.s32.totalorder %s27, 0
      %p54 = por %p52, %p53
      %s56 = sadd.s32 %s55, 1
      %p59 = scmp.eq.s32.totalorder %s21, 1
      %p60 = scmp.ne.s32.totalorder %s55, %s57
      %p61 = scmp.eq.s32.totalorder %s21, 0
      %p62 = por %p60, %p61
      %p63 = scmp.ne.s32.totalorder %s55, %s57
      %p64 = scmp.eq.s32.totalorder %s26, 1
      %p65 = por %p63, %p64
      %p66 = scmp.ne.s32.totalorder %s57, %s58
      %p67 = scmp.eq.s32.totalorder %s26, 0
      %p68 = por %p66, %p67
      %p69 = scmp.ne.s32.totalorder %s57, %s58
      %p70 = scmp.eq.s32.totalorder %s27, 1
      %p71 = por %p69, %p70
      %p73 = scmp.ne.s32.totalorder %s58, %s72
      %p74 = scmp.eq.s32.totalorder %s27, 0
      %p75 = por %p73, %p74
      %s77 = sadd.s32 %s76, 1
      %p80 = scmp.eq.s32.totalorder %s21, 1
      %p81 = scmp.ne.s32.totalorder %s76, %s78
      %p82 = scmp.eq.s32.totalorder %s21, 0
      %p83 = por %p81, %p82
      %p84 = scmp.ne.s32.totalorder %s76, %s78
      %p85 = scmp.eq.s32.totalorder %s26, 1
      %p86 = por %p84, %p85
      %p87 = scmp.ne.s32.totalorder %s78, %s79
      %p88 = scmp.eq.s32.totalorder %s26, 0
      %p89 = por %p87, %p88
      %p90 = scmp.ne.s32.totalorder %s78, %s79
      %p91 = scmp.eq.s32.totalorder %s27, 1
      %p92 = por %p90, %p91
      %p94 = scmp.ne.s32.totalorder %s79, %s93
      %p95 = scmp.eq.s32.totalorder %s27, 0
      %p96 = por %p94, %p95
      %s98 = sadd.s32 %s97, 1
      %p101 = scmp.eq.s32.totalorder %s21, 1
      %p102 = scmp.ne.s32.totalorder %s97, %s99
      %p103 = scmp.eq.s32.totalorder %s21, 0
      %p104 = por %p102, %p103
      %p105 = scmp.ne.s32.totalorder %s97, %s99
      %p106 = scmp.eq.s32.totalorder %s26, 1
      %p107 = por %p105, %p106
      %p108 = scmp.ne.s32.totalorder %s99, %s100
      %p109 = scmp.eq.s32.totalorder %s26, 0
      %p110 = por %p108, %p109
      %p111 = scmp.ne.s32.totalorder %s99, %s100
      %p112 = scmp.eq.s32.totalorder %s27, 1
      %p113 = por %p111, %p112
      %p115 = scmp.ne.s32.totalorder %s100, %s114
      %p116 = scmp.eq.s32.totalorder %s27, 0
      %p117 = por %p115, %p116
      %s119 = sadd.s32 %s118, 1
      %p122 = scmp.eq.s32.totalorder %s21, 1
      %p123 = scmp.ne.s32.totalorder %s118, %s120
      %p124 = scmp.eq.s32.totalorder %s21, 0
      %p125 = por %p123, %p124
      %p126 = scmp.ne.s32.totalorder %s118, %s120
      %p127 = scmp.eq.s32.totalorder %s26, 1
      %p128 = por %p126, %p127
      %p129 = scmp.ne.s32.totalorder %s120, %s121
      %p130 = scmp.eq.s32.totalorder %s26, 0
      %p131 = por %p129, %p130
      %p132 = scmp.ne.s32.totalorder %s120, %s121
      %p133 = scmp.eq.s32.totalorder %s27, 1
      %p134 = por %p132, %p133
      %p136 = scmp.ne.s32.totalorder %s121, %s135
      %p137 = scmp.eq.s32.totalorder %s27, 0
      %p138 = por %p136, %p137
      %s140 = sadd.s32 %s139, 1
      %p143 = scmp.eq.s32.totalorder %s21, 1
      %p144 = scmp.ne.s32.totalorder %s139, %s141
      %p145 = scmp.eq.s32.totalorder %s21, 0
      %p146 = por %p144, %p145
      %p147 = scmp.ne.s32.totalorder %s139, %s141
      %p148 = scmp.eq.s32.totalorder %s26, 1
      %p149 = por %p147, %p148
      %p150 = scmp.ne.s32.totalorder %s141, %s142
      %p151 = scmp.eq.s32.totalorder %s26, 0
      %p152 = por %p150, %p151
      %p153 = scmp.ne.s32.totalorder %s141, %s142
      %p154 = scmp.eq.s32.totalorder %s27, 1
      %p155 = por %p153, %p154
      %p157 = scmp.ne.s32.totalorder %s142, %s156
      %p158 = scmp.eq.s32.totalorder %s27, 0
      %p159 = por %p157, %p158
      %s161 = sadd.s32 %s160, 1
      %p164 = scmp.eq.s32.totalorder %s21, 1
      %p165 = scmp.ne.s32.totalorder %s160, %s162
      %p166 = scmp.eq.s32.totalorder %s21, 0
      %p167 = por %p165, %p166
      %p168 = scmp.ne.s32.totalorder %s160, %s162
      %p169 = scmp.eq.s32.totalorder %s26, 1
      %p170 = por %p168, %p169
      %p171 = scmp.ne.s32.totalorder %s162, %s163
      %p172 = scmp.eq.s32.totalorder %s26, 0
      %p173 = por %p171, %p172
      %p174 = scmp.ne.s32.totalorder %s162, %s163
      %p175 = scmp.eq.s32.totalorder %s27, 1
      %p176 = por %p174, %p175
      %p178 = scmp.ne.s32.totalorder %s163, %s177
      %p179 = scmp.eq.s32.totalorder %s27, 0
      %p180 = por %p178, %p179
      %s182 = sadd.s32 %s181, 1
      %p185 = scmp.eq.s32.totalorder %s21, 1
      %p186 = scmp.ne.s32.totalorder %s181, %s183
      %p187 = scmp.eq.s32.totalorder %s21, 0
      %p188 = por %p186, %p187
      %p189 = scmp.ne.s32.totalorder %s181, %s183
      %p190 = scmp.eq.s32.totalorder %s26, 1
      %p191 = por %p189, %p190
      %p192 = scmp.ne.s32.totalorder %s183, %s184
      %p193 = scmp.eq.s32.totalorder %s26, 0
      %p194 = por %p192, %p193
      %p195 = scmp.ne.s32.totalorder %s183, %s184
      %p196 = scmp.eq.s32.totalorder %s27, 1
      %p197 = por %p195, %p196
      %p199 = scmp.ne.s32.totalorder %s184, %s198
      %p200 = scmp.eq.s32.totalorder %s27, 0
      %p201 = por %p199, %p200
      %s202 = ssub.s32 %s21, %s28
      %p203 = scmp.eq.s32.totalorder %s202, 0
      %s205 = sadd.s32 %s204, 1
      %s206 = scalar_select %p203, %s204, %s205
      %p209 = pneg %p203
      %p210 = scmp.eq.s32.totalorder %s21, 1
      %p211 = por %p209, %p210
      %p212 = scmp.ne.s32.totalorder %s204, %s207
      %p213 = scmp.eq.s32.totalorder %s21, 0
      %p214 = por %p212, %p213
      %p215 = scmp.ne.s32.totalorder %s204, %s207
      %p216 = scmp.eq.s32.totalorder %s26, 1
      %p217 = por %p215, %p216
      %p218 = scmp.ne.s32.totalorder %s207, %s208
      %p219 = scmp.eq.s32.totalorder %s26, 0
      %p220 = por %p218, %p219
      %p221 = scmp.ne.s32.totalorder %s207, %s208
      %p222 = scmp.eq.s32.totalorder %s27, 1
      %p223 = por %p221, %p222
      %p225 = scmp.ne.s32.totalorder %s208, %s224
      %p226 = scmp.eq.s32.totalorder %s27, 0
      %p227 = por %p225, %p226
      %p228 = scmp.le.s32.totalorder 1, %s21
      %p229 = scmp.lt.s32.totalorder %s21, 3
      %p230 = pnand %p228, %p229
      %p231 = pneg %p230
      // Predicated region
      $region9: #{tpu_custom_call.1} parent=5 // pred_check
        _
      $region10: #{tpu_custom_call.1} parent=5 // pred_check_branch
        %233 = sbr.rel (%p230) target = $region12
      $region11: #{tpu_custom_call.1} parent=5 // pred_region
        %s234 = ssub.s32 %s21, 1
        // Predicated region
        $region13: #{tpu_custom_call.1} parent=11 // pred_check
          %p235 = pneg %p68
        $region14: #{tpu_custom_call.1} parent=11 // pred_check_branch
          %237 = sbr.rel (%p235) target = $region16
        $region15: #{tpu_custom_call.1} parent=11 // pred_region
          _
        $region16: #{tpu_custom_call.1} parent=11 // pred_fallthru
          _
        // Predicated region
        $region17: #{tpu_custom_call.1} parent=11 // pred_check
          %p238 = pneg %p89
        $region18: #{tpu_custom_call.1} parent=11 // pred_check_branch
          %240 = sbr.rel (%p238) target = $region20
        $region19: #{tpu_custom_call.1} parent=11 // pred_region
          _
        $region20: #{tpu_custom_call.1} parent=11 // pred_fallthru
          _
        // Predicated region
        $region21: #{tpu_custom_call.1} parent=11 // pred_check
          %p241 = pneg %p110
        $region22: #{tpu_custom_call.1} parent=11 // pred_check_branch
          %243 = sbr.rel (%p241) target = $region24
        $region23: #{tpu_custom_call.1} parent=11 // pred_region
          _
        $region24: #{tpu_custom_call.1} parent=11 // pred_fallthru
          _
        // Predicated region
        $region25: #{tpu_custom_call.1} parent=11 // pred_check
          %p244 = pneg %p131
        $region26: #{tpu_custom_call.1} parent=11 // pred_check_branch
          %246 = sbr.rel (%p244) target = $region28
        $region27: #{tpu_custom_call.1} parent=11 // pred_region
          _
        $region28: #{tpu_custom_call.1} parent=11 // pred_fallthru
          _
        // Predicated region
        $region29: #{tpu_custom_call.1} parent=11 // pred_check
          %p247 = pneg %p152
        $region30: #{tpu_custom_call.1} parent=11 // pred_check_branch
          %249 = sbr.rel (%p247) target = $region32
        $region31: #{tpu_custom_call.1} parent=11 // pred_region
          %251 = vsyncadd [#allocation8], 0
          %s253 = sshll.u32 %s5, 4
          %s254 = int_to_ptr.hbm [resolvable:$true] %s253
          %s255 = sshll.u32 [#allocation7], 4
          %s256 = int_to_ptr.vmem [resolvable:$true] %s255
          %258 = dma.hbm_to_vmem [thread:$0]  %s254, 128, %s256, [#allocation8]
        $region32: #{tpu_custom_call.1} parent=11 // pred_fallthru
          _
        // Predicated region
        $region33: #{tpu_custom_call.1} parent=11 // pred_check
          %p259 = pneg %p173
        $region34: #{tpu_custom_call.1} parent=11 // pred_check_branch
          %261 = sbr.rel (%p259) target = $region36
        $region35: #{tpu_custom_call.1} parent=11 // pred_region
          _
        $region36: #{tpu_custom_call.1} parent=11 // pred_fallthru
          _
        // Predicated region
        $region37: #{tpu_custom_call.1} parent=11 // pred_check
          %p262 = pneg %p194
        $region38: #{tpu_custom_call.1} parent=11 // pred_check_branch
          %264 = sbr.rel (%p262) target = $region40
        $region39: #{tpu_custom_call.1} parent=11 // pred_region
          _
        $region40: #{tpu_custom_call.1} parent=11 // pred_fallthru
          _
      $region12: #{tpu_custom_call.1} parent=5 // pred_fallthru
        _
      %p265 = scmp.lt.s32.totalorder %s21, 2
      // Predicated region
      $region41: #{tpu_custom_call.1} parent=5 // pred_check
        %p266 = pneg %p265
      $region42: #{tpu_custom_call.1} parent=5 // pred_check_branch
        %268 = sbr.rel (%p266) target = $region44
      $region43: #{tpu_custom_call.1} parent=5 // pred_region
        // Predicated region
        $region45: #{tpu_custom_call.1} parent=43 // pred_check
          %p269 = pneg %p41
        $region46: #{tpu_custom_call.1} parent=43 // pred_check_branch
          %271 = sbr.rel (%p269) target = $region48
        $region47: #{tpu_custom_call.1} parent=43 // pred_region
          %s272 = sand.u32 %s31, 1
          %s273 = scalar_lea.sflag [#allocation5], %s272
          %s274 = sand.u32 %s31, 1
          %s275 = smul.addr %s274, 8
          %s276 = scalar_lea.vmem [#allocation4], %s275
          %278 = vsyncadd %s273, 0
          %s279 = smul.addr %s21, 2
          %s280 = smul.addr %s279, 4
          %s281 = scalar_lea.hbm %s0, %s280
          %s283 = sshll.u32 %s281, 4
          %s284 = int_to_ptr.hbm [resolvable:$true] %s283
          %s285 = sshll.u32 %s276, 4
          %s286 = int_to_ptr.vmem [resolvable:$true] %s285
          %288 = dma.hbm_to_vmem [thread:$0]  %s284, 128, %s286, %s273
        $region48: #{tpu_custom_call.1} parent=43 // pred_fallthru
          _
      $region44: #{tpu_custom_call.1} parent=5 // pred_fallthru
        _
      %p289 = scmp.le.s32.totalorder 1, %s21
      %p290 = scmp.lt.s32.totalorder %s21, 3
      %p291 = pnand %p289, %p290
      %p292 = pneg %p291
      // Predicated region
      $region49: #{tpu_custom_call.1} parent=5 // pred_check
        _
      $region50: #{tpu_custom_call.1} parent=5 // pred_check_branch
        %294 = sbr.rel (%p291) target = $region52
      $region51: #{tpu_custom_call.1} parent=5 // pred_region
        %s295 = ssub.s32 %s21, 1
        %s296 = sand.u32 %s34, 1
        %s297 = scalar_lea.sflag [#allocation5], %s296
        %s298 = sand.u32 %s34, 1
        %s299 = smul.addr %s298, 8
        %s300 = scalar_lea.vmem [#allocation4], %s299
        // Predicated region
        $region53: #{tpu_custom_call.1} parent=51 // pred_check
          %p301 = pneg %p47
        $region54: #{tpu_custom_call.1} parent=51 // pred_check_branch
          %303 = sbr.rel (%p301) target = $region56
        $region55: #{tpu_custom_call.1} parent=51 // pred_region
          %305 = dma.done %s297, 128
        $region56: #{tpu_custom_call.1} parent=51 // pred_fallthru
          _
        // Predicated region
        $region57: #{tpu_custom_call.1} parent=51 // pred_check
          %p306 = pneg %p152
        $region58: #{tpu_custom_call.1} parent=51 // pred_check_branch
          %308 = sbr.rel (%p306) target = $region60
        $region59: #{tpu_custom_call.1} parent=51 // pred_region
          %310 = dma.done [#allocation8], 128
        $region60: #{tpu_custom_call.1} parent=51 // pred_fallthru
          _
        %s311 = sand.u32 %s34, 1
        %s312 = scalar_lea.sflag [#allocation5], %s311
        %s313 = sand.u32 %s34, 1
        %s314 = smul.addr %s313, 8
        %s315 = scalar_lea.vmem [#allocation4], %s314
        %p316 = pneg %p47
        %p317 = pneg %p44
        %p318 = pneg %p68
        %p319 = pneg %p65
        %p320 = pneg %p89
        %p321 = pneg %p86
        %p322 = pneg %p110
        %p323 = pneg %p107
        %p324 = pneg %p131
        %p325 = pneg %p128
        %p326 = pneg %p152
        %p327 = pneg %p149
        %p328 = pneg %p173
        %p329 = pneg %p170
        %p330 = pneg %p194
        %p331 = pneg %p191
        %p332 = pneg %p220
        %p333 = pneg %p217
        %s334 = sand.u32 %s207, 1
        %s335 = scalar_lea.sflag [#allocation6], %s334
        %s336 = sand.u32 %s207, 1
        %s337 = smul.addr %s336, 8
        %s338 = scalar_lea.vmem [#allocation9], %s337
        %v339 = vld [vmem:[%s1] ss:$2 sm:$0x3]
        %s340 = scalar_lea.vmem %s1, 1
        %v341 = vld [vmem:[%s340] ss:$2 sm:$0x3]
        %342 = vst [vmem:[#allocation2] sm:$0xff] 0.0
        %343 = vst [vmem:[#allocation2 + $0x8] sm:$0xff] 0.0
        %v344 = vld [vmem:[%s300] sm:$0xff]
        %345 = vst [vmem:[#allocation2 + $0x4] sm:$0xff] %v344
        %v346 = vld [vmem:[%s2] sm:$0xff]
        %v347 = vld [vmem:[#allocation2] sm:$0xff]
        %v348 = vld [vmem:[#allocation2 + $0x8] sm:$0xf]
        %v350 = vperm.slane %v339, 0
        %v351 = vperm.slane %v339, 1
        %v352 = vrot.slane %v351, 4
        %vm353 = vcmask 1043456
        %v354 = vsel %vm353, %v350, %v352
        %355 = vrot.lane.b32.xlu0 %v354, 111
        %v356 = vpop.permute.xlu0 %355
        %v357 = vrot.slane %v356, 4
        %vm358 = vcmask 908288
        %v359 = vsel %vm358, %v357, %v356
        %v362 = vmul.f32 %v347, %v359
        %v363 = vmul.f32 %v348, %v357
        %366 = vst [vmem:[#allocation1] ss:$2 sm:$0xff] %v362
        %s367 = scalar_lea.vmem [#allocation1], 16
        %368 = vst [vmem:[%s367] ss:$2 sm:$0xff] %v363
        %v369 = vld.sshfl [vmem:[#allocation1] sm:$0xff pattern:$0x75316420]
        %v370 = vld.sshfl [vmem:[#allocation1 + $0x8] sm:$0xff pattern:$0x75316420]
        %v371 = vld.sshfl [vmem:[#allocation1 + $0x10] sm:$0xff pattern:$0x75316420]
        %372 = vrot.lane.b32.xlu0 %v369, 17
        %v373 = vpop.permute.xlu0 %372
        %374 = vrot.lane.b32.xlu0 %v370, 17
        %v375 = vpop.permute.xlu0 %374
        %376 = vrot.lane.b32.xlu0 %v371, 17
        %v377 = vpop.permute.xlu0 %376
        %vm378 = vcmask 138240
        %v379 = vsel %vm378, %v373, %v375
        %v380 = vsel %vm378, %v375, %v377
        %383 = vst [vmem:[#allocation3] sm:$0xf] %v379
        %384 = vst [vmem:[#allocation3 + $0x8] sm:$0xf] %v380
        %v385 = vld [vmem:[#allocation2] sm:$0xff]
        %v386 = vld [vmem:[#allocation2 + $0x8] sm:$0xf]
        %s389 = scalar_lea.vmem [#allocation1], 1
        %390 = vst [vmem:[%s389] ss:$2 sm:$0xff] %v385
        %s391 = scalar_lea.vmem [#allocation1], 17
        %392 = vst [vmem:[%s391] ss:$2 sm:$0xff] %v386
        %v393 = vld.sshfl [vmem:[#allocation1] sm:$0xff pattern:$0x75316420]
        %v394 = vld.sshfl [vmem:[#allocation1 + $0x8] sm:$0xff pattern:$0x75316420]
        %v395 = vld.sshfl [vmem:[#allocation1 + $0x10] sm:$0xff pattern:$0x75316420]
        %396 = vrot.lane.b32.xlu0 %v393, 16
        %v397 = vpop.permute.xlu0 %396
        %398 = vrot.lane.b32.xlu0 %v394, 16
        %v399 = vpop.permute.xlu0 %398
        %400 = vrot.lane.b32.xlu0 %v395, 16
        %v401 = vpop.permute.xlu0 %400
        %vm402 = vcmask 130048
        %v403 = vsel %vm402, %v397, %v399
        %v404 = vsel %vm402, %v399, %v401
        %407 = vst [vmem:[#allocation3] sm:$0xf0] %v403
        %408 = vst [vmem:[#allocation3 + $0x8] sm:$0xf0] %v404
        %v409 = vld [vmem:[#allocation2] sm:$0xff]
        %v410 = vld [vmem:[#allocation2 + $0x8] sm:$0xf]
        %v412 = vperm.slane %v341, 0
        %v413 = vperm.slane %v341, 1
        %v414 = vrot.slane %v413, 4
        %v415 = vsel %vm353, %v412, %v414
        %416 = vrot.lane.b32.xlu0 %v415, 113
        %v417 = vpop.permute.xlu0 %416
        %v418 = vrot.slane %v417, 4
        %vm419 = vcmask 924672
        %v420 = vsel %vm419, %v418, %v417
        %v423 = vmul.f32 %v409, %v420
        %v424 = vmul.f32 %v410, %v418
        %427 = vst [vmem:[#allocation1] ss:$2 sm:$0xff] %v423
        %s428 = scalar_lea.vmem [#allocation1], 16
        %429 = vst [vmem:[%s428] ss:$2 sm:$0xff] %v424
        %v430 = vld.sshfl [vmem:[#allocation1] sm:$0xff pattern:$0x75316420]
        %v431 = vld.sshfl [vmem:[#allocation1 + $0x8] sm:$0xff pattern:$0x75316420]
        %v432 = vld.sshfl [vmem:[#allocation1 + $0x10] sm:$0xff pattern:$0x75316420]
        %433 = vrot.lane.b32.xlu0 %v430, 15
        %v434 = vpop.permute.xlu0 %433
        %435 = vrot.lane.b32.xlu0 %v431, 15
        %v436 = vpop.permute.xlu0 %435
        %437 = vrot.lane.b32.xlu0 %v432, 15
        %v438 = vpop.permute.xlu0 %437
        %vm439 = vcmask 121856
        %v440 = vsel %vm439, %v434, %v436
        %v441 = vsel %vm439, %v436, %v438
        %444 = vst [vmem:[#allocation3 + $0x10] sm:$0xf] %v440
        %445 = vst [vmem:[#allocation3 + $0x18] sm:$0xf] %v441
        %v446 = vld [vmem:[#allocation2] sm:$0xff]
        %v447 = vld [vmem:[#allocation2 + $0x8] sm:$0xf]
        %448 = vrot.lane.b32.xlu0 %v354, 127
        %v449 = vpop.permute.xlu0 %448
        %v450 = vrot.slane %v449, 4
        %vm451 = vcmask 1039360
        %v452 = vsel %vm451, %v450, %v449
        %v455 = vmul.f32 %v446, %v452
        %v456 = vmul.f32 %v447, %v450
        %s459 = scalar_lea.vmem [#allocation1], 1
        %460 = vst [vmem:[%s459] ss:$2 sm:$0xff] %v455
        %s461 = scalar_lea.vmem [#allocation1], 17
        %462 = vst [vmem:[%s461] ss:$2 sm:$0xff] %v456
        %v463 = vld.sshfl [vmem:[#allocation1] sm:$0xff pattern:$0x75316420]
        %v464 = vld.sshfl [vmem:[#allocation1 + $0x8] sm:$0xff pattern:$0x75316420]
        %v465 = vld.sshfl [vmem:[#allocation1 + $0x10] sm:$0xff pattern:$0x75316420]
        %466 = vrot.lane.b32.xlu0 %v463, 1
        %v467 = vpop.permute.xlu0 %466
        %468 = vrot.lane.b32.xlu0 %v464, 1
        %v469 = vpop.permute.xlu0 %468
        %470 = vrot.lane.b32.xlu0 %v465, 1
        %v471 = vpop.permute.xlu0 %470
        %vm472 = vcmask 7168
        %v473 = vsel %vm472, %v467, %v469
        %v474 = vsel %vm472, %v469, %v471
        %477 = vst [vmem:[#allocation3 + $0x10] sm:$0xf0] %v473
        %478 = vst [vmem:[#allocation3 + $0x18] sm:$0xf0] %v474
        %v479 = vld [vmem:[#allocation2 + $0x4] sm:$0xff]
        %481 = vst [vmem:[#allocation1] ss:$2 sm:$0xff] %v479
        %v482 = vld.sshfl [vmem:[#allocation1] sm:$0xff pattern:$0x75316420]
        %v483 = vld.sshfl [vmem:[#allocation1 + $0x8] sm:$0xff pattern:$0x75316420]
        %486 = vst [vmem:[#allocation3 + $0x20] sm:$0xf] %v482
        %487 = vst [vmem:[#allocation3 + $0x28] sm:$0xf] %v483
        %v488 = vld [vmem:[#allocation2 + $0x4] sm:$0xff]
        %v489 = vld [vmem:[#allocation2 + $0xc] sm:$0xf]
        %490 = vrot.lane.b32.xlu0 %v415, 1
        %v491 = vpop.permute.xlu0 %490
        %v492 = vrot.slane %v491, 4
        %v493 = vsel %vm472, %v492, %v491
        %v496 = vmul.f32 %v488, %v493
        %v497 = vmul.f32 %v489, %v492
        %s500 = scalar_lea.vmem [#allocation1], 1
        %501 = vst [vmem:[%s500] ss:$2 sm:$0xff] %v496
        %s502 = scalar_lea.vmem [#allocation1], 17
        %503 = vst [vmem:[%s502] ss:$2 sm:$0xff] %v497
        %v504 = vld.sshfl [vmem:[#allocation1] sm:$0xff pattern:$0x75316420]
        %v505 = vld.sshfl [vmem:[#allocation1 + $0x8] sm:$0xff pattern:$0x75316420]
        %v506 = vld.sshfl [vmem:[#allocation1 + $0x10] sm:$0xff pattern:$0x75316420]
        %507 = vrot.lane.b32.xlu0 %v504, 127
        %v508 = vpop.permute.xlu0 %507
        %509 = vrot.lane.b32.xlu0 %v505, 127
        %v510 = vpop.permute.xlu0 %509
        %511 = vrot.lane.b32.xlu0 %v506, 127
        %v512 = vpop.permute.xlu0 %511
        %v513 = vsel %vm451, %v508, %v510
        %v514 = vsel %vm451, %v510, %v512
        %517 = vst [vmem:[#allocation3 + $0x20] sm:$0xf0] %v513
        %518 = vst [vmem:[#allocation3 + $0x28] sm:$0xf0] %v514
        %v519 = vld [vmem:[#allocation2 + $0x4] sm:$0xff]
        %v520 = vld [vmem:[#allocation2 + $0xc] sm:$0xf]
        %521 = vrot.lane.b32.xlu0 %v354, 15
        %v522 = vpop.permute.xlu0 %521
        %v523 = vrot.slane %v522, 4
        %v524 = vsel %vm439, %v523, %v522
        %v527 = vmul.f32 %v519, %v524
        %v528 = vmul.f32 %v520, %v523
        %531 = vst [vmem:[#allocation1] ss:$2 sm:$0xff] %v527
        %s532 = scalar_lea.vmem [#allocation1], 16
        %533 = vst [vmem:[%s532] ss:$2 sm:$0xff] %v528
        %v534 = vld.sshfl [vmem:[#allocation1] sm:$0xff pattern:$0x75316420]
        %v535 = vld.sshfl [vmem:[#allocation1 + $0x8] sm:$0xff pattern:$0x75316420]
        %v536 = vld.sshfl [vmem:[#allocation1 + $0x10] sm:$0xff pattern:$0x75316420]
        %537 = vrot.lane.b32.xlu0 %v534, 113
        %v538 = vpop.permute.xlu0 %537
        %539 = vrot.lane.b32.xlu0 %v535, 113
        %v540 = vpop.permute.xlu0 %539
        %541 = vrot.lane.b32.xlu0 %v536, 113
        %v542 = vpop.permute.xlu0 %541
        %v543 = vsel %vm419, %v538, %v540
        %v544 = vsel %vm419, %v540, %v542
        %547 = vst [vmem:[#allocation3 + $0x30] sm:$0xf] %v543
        %548 = vst [vmem:[#allocation3 + $0x38] sm:$0xf] %v544
        %v549 = vld [vmem:[#allocation2 + $0x4] sm:$0xff]
        %v550 = vld [vmem:[#allocation2 + $0xc] sm:$0xf]
        %s553 = scalar_lea.vmem [#allocation1], 1
        %554 = vst [vmem:[%s553] ss:$2 sm:$0xff] %v549
        %s555 = scalar_lea.vmem [#allocation1], 17
        %556 = vst [vmem:[%s555] ss:$2 sm:$0xff] %v550
        %v557 = vld.sshfl [vmem:[#allocation1] sm:$0xff pattern:$0x75316420]
        %v558 = vld.sshfl [vmem:[#allocation1 + $0x8] sm:$0xff pattern:$0x75316420]
        %v559 = vld.sshfl [vmem:[#allocation1 + $0x10] sm:$0xff pattern:$0x75316420]
        %560 = vrot.lane.b32.xlu0 %v557, 112
        %v561 = vpop.permute.xlu0 %560
        %562 = vrot.lane.b32.xlu0 %v558, 112
        %v563 = vpop.permute.xlu0 %562
        %564 = vrot.lane.b32.xlu0 %v559, 112
        %v565 = vpop.permute.xlu0 %564
        %vm566 = vcmask 916480
        %v567 = vsel %vm566, %v561, %v563
        %v568 = vsel %vm566, %v563, %v565
        %571 = vst [vmem:[#allocation3 + $0x30] sm:$0xf0] %v567
        %572 = vst [vmem:[#allocation3 + $0x38] sm:$0xf0] %v568
        %v573 = vld [vmem:[#allocation2 + $0x4] sm:$0xff]
        %v574 = vld [vmem:[#allocation2 + $0xc] sm:$0xf]
        %575 = vrot.lane.b32.xlu0 %v415, 17
        %v576 = vpop.permute.xlu0 %575
        %v577 = vrot.slane %v576, 4
        %v578 = vsel %vm378, %v577, %v576
        %v581 = vmul.f32 %v573, %v578
        %v582 = vmul.f32 %v574, %v577
        %585 = vst [vmem:[#allocation1] ss:$2 sm:$0xff] %v581
        %s586 = scalar_lea.vmem [#allocation1], 16
        %587 = vst [vmem:[%s586] ss:$2 sm:$0xff] %v582
        %v588 = vld.sshfl [vmem:[#allocation1] sm:$0xff pattern:$0x75316420]
        %v589 = vld.sshfl [vmem:[#allocation1 + $0x8] sm:$0xff pattern:$0x75316420]
        %v590 = vld.sshfl [vmem:[#allocation1 + $0x10] sm:$0xff pattern:$0x75316420]
        %591 = vrot.lane.b32.xlu0 %v588, 111
        %v592 = vpop.permute.xlu0 %591
        %593 = vrot.lane.b32.xlu0 %v589, 111
        %v594 = vpop.permute.xlu0 %593
        %595 = vrot.lane.b32.xlu0 %v590, 111
        %v596 = vpop.permute.xlu0 %595
        %v597 = vsel %vm358, %v592, %v594
        %v598 = vsel %vm358, %v594, %v596
        %601 = vst [vmem:[#allocation3 + $0x40] sm:$0xf] %v597
        %602 = vst [vmem:[#allocation3 + $0x48] sm:$0xf] %v598
        %v603 = vld [vmem:[#allocation3] sm:$0xff]
        %v604 = vld [vmem:[#allocation3 + $0x8] sm:$0xff]
        %v605 = vld [vmem:[#allocation3 + $0x10] sm:$0xff]
        %v606 = vld [vmem:[#allocation3 + $0x18] sm:$0xff]
        %v607 = vld [vmem:[#allocation3 + $0x20] sm:$0xff]
        %v608 = vld [vmem:[#allocation3 + $0x28] sm:$0xff]
        %v609 = vld [vmem:[#allocation3 + $0x30] sm:$0xff]
        %v610 = vld [vmem:[#allocation3 + $0x38] sm:$0xff]
        %v611 = vld [vmem:[#allocation3 + $0x40] sm:$0xf]
        %v612 = vld [vmem:[#allocation3 + $0x48] sm:$0xf]
        %vm613 = vcmask 293888
        %v615 = vsel %vm613, %v346, 0
        %v618 = vsel %vm353, %v611, 0
        %v621 = vsel %vm353, %v612, 0
        %623 = vmatpush.msra.mxu0 0.0
        %624 = vmatpush.msra.mxu0 0.0
        %625 = vmatpush.msra.mxu0 0.0
        %626 = vmatpush.msra.mxu0 0.0
        %627 = vmatpush.msra.mxu0 0.0
        %628 = vmatpush.msra.mxu0 0.0
        %629 = vmatpush.msra.mxu0 0.0
        %630 = vmatpush.msra.mxu0 0.0
        %631 = vmatpush.msra.mxu0 0.0
        %632 = vmatpush.msra.mxu0 0.0
        %633 = vmatpush.msra.mxu0 0.0
        %634 = vmatpush.msra.mxu0 %v618
        %635 = vmatpush.msra.mxu0 %v609
        %636 = vmatpush.msra.mxu0 %v607
        %637 = vmatpush.msra.mxu0 %v605
        %638 = vmatpush.msra.mxu0 %v603
        %639 = vmatmul.f32.gmra.mxu0 %v615
        %v640 = vpop.f32.mrf.mxu0
        %v641 = vadd.f32 0.0, %v640
        %642 = vdwg.mxu0
        %643 = vmatpush.msra.mxu0 0.0
        %644 = vmatpush.msra.mxu0 0.0
        %645 = vmatpush.msra.mxu0 0.0
        %646 = vmatpush.msra.mxu0 0.0
        %647 = vmatpush.msra.mxu0 0.0
        %648 = vmatpush.msra.mxu0 0.0
        %649 = vmatpush.msra.mxu0 0.0
        %650 = vmatpush.msra.mxu0 0.0
        %651 = vmatpush.msra.mxu0 0.0
        %652 = vmatpush.msra.mxu0 0.0
        %653 = vmatpush.msra.mxu0 0.0
        %654 = vmatpush.msra.mxu0 %v621
        %655 = vmatpush.msra.mxu0 %v610
        %656 = vmatpush.msra.mxu0 %v608
        %657 = vmatpush.msra.mxu0 %v606
        %658 = vmatpush.msra.mxu0 %v604
        %659 = vmatmul.f32.gmra.mxu0 %v615
        %v660 = vpop.f32.mrf.mxu0
        %v661 = vadd.f32 0.0, %v660
        %662 = vdwg.mxu0
        %v663 = vld [vmem:[%s3] sm:$0xf]
        %665 = vset.pattern.permute.xlu0 0
        %666 = vperm.xlu0 %665, %v663
        %v667 = vpop.permute.xlu0 %666
        %v669 = vmul.f32 %v641, %v667
        %v670 = vmul.f32 %v661, %v667
        %v671 = vld [vmem:[%s4] sm:$0xf]
        %673 = vset.pattern.permute.xlu0 0
        %674 = vperm.xlu0 %673, %v671
        %v675 = vpop.permute.xlu0 %674
        %v677 = vadd.f32 %v669, %v675
        %v678 = vadd.f32 %v670, %v675
        %v679 = vmax.f32 %v677, 0.0
        %v680 = vmax.f32 %v678, 0.0
        %v683 = vrot.slane %v680, 4
        %v684 = vsel %vm353, %v679, %v683
        %686 = vst [vmem:[#allocation2 + $0x4] sm:$0xff] %v684
        %v687 = vld [vmem:[#allocation7] sm:$0xff]
        %v688 = vld [vmem:[#allocation2] sm:$0xff]
        %v689 = vld [vmem:[#allocation2 + $0x8] sm:$0xf]
        %v690 = vmul.f32 %v688, %v359
        %v691 = vmul.f32 %v689, %v357
        %694 = vst [vmem:[#allocation1] ss:$2 sm:$0xff] %v690
        %s695 = scalar_lea.vmem [#allocation1], 16
        %696 = vst [vmem:[%s695] ss:$2 sm:$0xff] %v691
        %v697 = vld.sshfl [vmem:[#allocation1] sm:$0xff pattern:$0x75316420]
        %v698 = vld.sshfl [vmem:[#allocation1 + $0x8] sm:$0xff pattern:$0x75316420]
        %v699 = vld.sshfl [vmem:[#allocation1 + $0x10] sm:$0xff pattern:$0x75316420]
        %700 = vrot.lane.b32.xlu0 %v697, 17
        %v701 = vpop.permute.xlu0 %700
        %702 = vrot.lane.b32.xlu0 %v698, 17
        %v703 = vpop.permute.xlu0 %702
        %704 = vrot.lane.b32.xlu0 %v699, 17
        %v705 = vpop.permute.xlu0 %704
        %v706 = vsel %vm378, %v701, %v703
        %v707 = vsel %vm378, %v703, %v705
        %710 = vst [vmem:[#allocation3] sm:$0xf] %v706
        %711 = vst [vmem:[#allocation3 + $0x8] sm:$0xf] %v707
        %v712 = vld [vmem:[#allocation2] sm:$0xff]
        %v713 = vld [vmem:[#allocation2 + $0x8] sm:$0xf]
        %s716 = scalar_lea.vmem [#allocation1], 1
        %717 = vst [vmem:[%s716] ss:$2 sm:$0xff] %v712
        %s718 = scalar_lea.vmem [#allocation1], 17
        %719 = vst [vmem:[%s718] ss:$2 sm:$0xff] %v713
        %v720 = vld.sshfl [vmem:[#allocation1] sm:$0xff pattern:$0x75316420]
        %v721 = vld.sshfl [vmem:[#allocation1 + $0x8] sm:$0xff pattern:$0x75316420]
        %v722 = vld.sshfl [vmem:[#allocation1 + $0x10] sm:$0xff pattern:$0x75316420]
        %723 = vrot.lane.b32.xlu0 %v720, 16
        %v724 = vpop.permute.xlu0 %723
        %725 = vrot.lane.b32.xlu0 %v721, 16
        %v726 = vpop.permute.xlu0 %725
        %727 = vrot.lane.b32.xlu0 %v722, 16
        %v728 = vpop.permute.xlu0 %727
        %v729 = vsel %vm402, %v724, %v726
        %v730 = vsel %vm402, %v726, %v728
        %733 = vst [vmem:[#allocation3] sm:$0xf0] %v729
        %734 = vst [vmem:[#allocation3 + $0x8] sm:$0xf0] %v730
        %v735 = vld [vmem:[#allocation2] sm:$0xff]
        %v736 = vld [vmem:[#allocation2 + $0x8] sm:$0xf]
        %v737 = vmul.f32 %v735, %v420
        %v738 = vmul.f32 %v736, %v418
        %741 = vst [vmem:[#allocation1] ss:$2 sm:$0xff] %v737
        %s742 = scalar_lea.vmem [#allocation1], 16
        %743 = vst [vmem:[%s742] ss:$2 sm:$0xff] %v738
        %v744 = vld.sshfl [vmem:[#allocation1] sm:$0xff pattern:$0x75316420]
        %v745 = vld.sshfl [vmem:[#allocation1 + $0x8] sm:$0xff pattern:$0x75316420]
        %v746 = vld.sshfl [vmem:[#allocation1 + $0x10] sm:$0xff pattern:$0x75316420]
        %747 = vrot.lane.b32.xlu0 %v744, 15
        %v748 = vpop.permute.xlu0 %747
        %749 = vrot.lane.b32.xlu0 %v745, 15
        %v750 = vpop.permute.xlu0 %749
        %751 = vrot.lane.b32.xlu0 %v746, 15
        %v752 = vpop.permute.xlu0 %751
        %v753 = vsel %vm439, %v748, %v750
        %v754 = vsel %vm439, %v750, %v752
        %757 = vst [vmem:[#allocation3 + $0x10] sm:$0xf] %v753
        %758 = vst [vmem:[#allocation3 + $0x18] sm:$0xf] %v754
        %v759 = vld [vmem:[#allocation2] sm:$0xff]
        %v760 = vld [vmem:[#allocation2 + $0x8] sm:$0xf]
        %v761 = vmul.f32 %v759, %v452
        %v762 = vmul.f32 %v760, %v450
        %s765 = scalar_lea.vmem [#allocation1], 1
        %766 = vst [vmem:[%s765] ss:$2 sm:$0xff] %v761
        %s767 = scalar_lea.vmem [#allocation1], 17
        %768 = vst [vmem:[%s767] ss:$2 sm:$0xff] %v762
        %v769 = vld.sshfl [vmem:[#allocation1] sm:$0xff pattern:$0x75316420]
        %v770 = vld.sshfl [vmem:[#allocation1 + $0x8] sm:$0xff pattern:$0x75316420]
        %v771 = vld.sshfl [vmem:[#allocation1 + $0x10] sm:$0xff pattern:$0x75316420]
        %772 = vrot.lane.b32.xlu0 %v769, 1
        %v773 = vpop.permute.xlu0 %772
        %774 = vrot.lane.b32.xlu0 %v770, 1
        %v775 = vpop.permute.xlu0 %774
        %776 = vrot.lane.b32.xlu0 %v771, 1
        %v777 = vpop.permute.xlu0 %776
        %v778 = vsel %vm472, %v773, %v775
        %v779 = vsel %vm472, %v775, %v777
        %782 = vst [vmem:[#allocation3 + $0x10] sm:$0xf0] %v778
        %783 = vst [vmem:[#allocation3 + $0x18] sm:$0xf0] %v779
        %v784 = vld [vmem:[#allocation2 + $0x4] sm:$0xff]
        %786 = vst [vmem:[#allocation1] ss:$2 sm:$0xff] %v784
        %v787 = vld.sshfl [vmem:[#allocation1] sm:$0xff pattern:$0x75316420]
        %v788 = vld.sshfl [vmem:[#allocation1 + $0x8] sm:$0xff pattern:$0x75316420]
        %791 = vst [vmem:[#allocation3 + $0x20] sm:$0xf] %v787
        %792 = vst [vmem:[#allocation3 + $0x28] sm:$0xf] %v788
        %v793 = vld [vmem:[#allocation2 + $0x4] sm:$0xff]
        %v794 = vld [vmem:[#allocation2 + $0xc] sm:$0xf]
        %v795 = vmul.f32 %v793, %v493
        %v796 = vmul.f32 %v794, %v492
        %s799 = scalar_lea.vmem [#allocation1], 1
        %800 = vst [vmem:[%s799] ss:$2 sm:$0xff] %v795
        %s801 = scalar_lea.vmem [#allocation1], 17
        %802 = vst [vmem:[%s801] ss:$2 sm:$0xff] %v796
        %v803 = vld.sshfl [vmem:[#allocation1] sm:$0xff pattern:$0x75316420]
        %v804 = vld.sshfl [vmem:[#allocation1 + $0x8] sm:$0xff pattern:$0x75316420]
        %v805 = vld.sshfl [vmem:[#allocation1 + $0x10] sm:$0xff pattern:$0x75316420]
        %806 = vrot.lane.b32.xlu0 %v803, 127
        %v807 = vpop.permute.xlu0 %806
        %808 = vrot.lane.b32.xlu0 %v804, 127
        %v809 = vpop.permute.xlu0 %808
        %810 = vrot.lane.b32.xlu0 %v805, 127
        %v811 = vpop.permute.xlu0 %810
        %v812 = vsel %vm451, %v807, %v809
        %v813 = vsel %vm451, %v809, %v811
        %816 = vst [vmem:[#allocation3 + $0x20] sm:$0xf0] %v812
        %817 = vst [vmem:[#allocation3 + $0x28] sm:$0xf0] %v813
        %v818 = vld [vmem:[#allocation2 + $0x4] sm:$0xff]
        %v819 = vld [vmem:[#allocation2 + $0xc] sm:$0xf]
        %v820 = vmul.f32 %v818, %v524
        %v821 = vmul.f32 %v819, %v523
        %824 = vst [vmem:[#allocation1] ss:$2 sm:$0xff] %v820
        %s825 = scalar_lea.vmem [#allocation1], 16
        %826 = vst [vmem:[%s825] ss:$2 sm:$0xff] %v821
        %v827 = vld.sshfl [vmem:[#allocation1] sm:$0xff pattern:$0x75316420]
        %v828 = vld.sshfl [vmem:[#allocation1 + $0x8] sm:$0xff pattern:$0x75316420]
        %v829 = vld.sshfl [vmem:[#allocation1 + $0x10] sm:$0xff pattern:$0x75316420]
        %830 = vrot.lane.b32.xlu0 %v827, 113
        %v831 = vpop.permute.xlu0 %830
        %832 = vrot.lane.b32.xlu0 %v828, 113
        %v833 = vpop.permute.xlu0 %832
        %834 = vrot.lane.b32.xlu0 %v829, 113
        %v835 = vpop.permute.xlu0 %834
        %v836 = vsel %vm419, %v831, %v833
        %v837 = vsel %vm419, %v833, %v835
        %840 = vst [vmem:[#allocation3 + $0x30] sm:$0xf] %v836
        %841 = vst [vmem:[#allocation3 + $0x38] sm:$0xf] %v837
        %v842 = vld [vmem:[#allocation2 + $0x4] sm:$0xff]
        %v843 = vld [vmem:[#allocation2 + $0xc] sm:$0xf]
        %s846 = scalar_lea.vmem [#allocation1], 1
        %847 = vst [vmem:[%s846] ss:$2 sm:$0xff] %v842
        %s848 = scalar_lea.vmem [#allocation1], 17
        %849 = vst [vmem:[%s848] ss:$2 sm:$0xff] %v843
        %v850 = vld.sshfl [vmem:[#allocation1] sm:$0xff pattern:$0x75316420]
        %v851 = vld.sshfl [vmem:[#allocation1 + $0x8] sm:$0xff pattern:$0x75316420]
        %v852 = vld.sshfl [vmem:[#allocation1 + $0x10] sm:$0xff pattern:$0x75316420]
        %853 = vrot.lane.b32.xlu0 %v850, 112
        %v854 = vpop.permute.xlu0 %853
        %855 = vrot.lane.b32.xlu0 %v851, 112
        %v856 = vpop.permute.xlu0 %855
        %857 = vrot.lane.b32.xlu0 %v852, 112
        %v858 = vpop.permute.xlu0 %857
        %v859 = vsel %vm566, %v854, %v856
        %v860 = vsel %vm566, %v856, %v858
        %863 = vst [vmem:[#allocation3 + $0x30] sm:$0xf0] %v859
        %864 = vst [vmem:[#allocation3 + $0x38] sm:$0xf0] %v860
        %v865 = vld [vmem:[#allocation2 + $0x4] sm:$0xff]
        %v866 = vld [vmem:[#allocation2 + $0xc] sm:$0xf]
        %v867 = vmul.f32 %v865, %v578
        %v868 = vmul.f32 %v866, %v577
        %871 = vst [vmem:[#allocation1] ss:$2 sm:$0xff] %v867
        %s872 = scalar_lea.vmem [#allocation1], 16
        %873 = vst [vmem:[%s872] ss:$2 sm:$0xff] %v868
        %v874 = vld.sshfl [vmem:[#allocation1] sm:$0xff pattern:$0x75316420]
        %v875 = vld.sshfl [vmem:[#allocation1 + $0x8] sm:$0xff pattern:$0x75316420]
        %v876 = vld.sshfl [vmem:[#allocation1 + $0x10] sm:$0xff pattern:$0x75316420]
        %877 = vrot.lane.b32.xlu0 %v874, 111
        %v878 = vpop.permute.xlu0 %877
        %879 = vrot.lane.b32.xlu0 %v875, 111
        %v880 = vpop.permute.xlu0 %879
        %881 = vrot.lane.b32.xlu0 %v876, 111
        %v882 = vpop.permute.xlu0 %881
        %v883 = vsel %vm358, %v878, %v880
        %v884 = vsel %vm358, %v880, %v882
        %887 = vst [vmem:[#allocation3 + $0x40] sm:$0xf] %v883
        %888 = vst [vmem:[#allocation3 + $0x48] sm:$0xf] %v884
        %v889 = vld [vmem:[#allocation3] sm:$0xff]
        %v890 = vld [vmem:[#allocation3 + $0x8] sm:$0xff]
        %v891 = vld [vmem:[#allocation3 + $0x10] sm:$0xff]
        %v892 = vld [vmem:[#allocation3 + $0x18] sm:$0xff]
        %v893 = vld [vmem:[#allocation3 + $0x20] sm:$0xff]
        %v894 = vld [vmem:[#allocation3 + $0x28] sm:$0xff]
        %v895 = vld [vmem:[#allocation3 + $0x30] sm:$0xff]
        %v896 = vld [vmem:[#allocation3 + $0x38] sm:$0xff]
        %v897 = vld [vmem:[#allocation3 + $0x40] sm:$0xf]
        %v898 = vld [vmem:[#allocation3 + $0x48] sm:$0xf]
        %v900 = vsel %vm613, %v687, 0
        %v903 = vsel %vm353, %v897, 0
        %v906 = vsel %vm353, %v898, 0
        %908 = vmatpush.msra.mxu0 0.0
        %909 = vmatpush.msra.mxu0 0.0
        %910 = vmatpush.msra.mxu0 0.0
        %911 = vmatpush.msra.mxu0 0.0
        %912 = vmatpush.msra.mxu0 0.0
        %913 = vmatpush.msra.mxu0 0.0
        %914 = vmatpush.msra.mxu0 0.0
        %915 = vmatpush.msra.mxu0 0.0
        %916 = vmatpush.msra.mxu0 0.0
        %917 = vmatpush.msra.mxu0 0.0
        %918 = vmatpush.msra.mxu0 0.0
        %919 = vmatpush.msra.mxu0 %v903
        %920 = vmatpush.msra.mxu0 %v895
        %921 = vmatpush.msra.mxu0 %v893
        %922 = vmatpush.msra.mxu0 %v891
        %923 = vmatpush.msra.mxu0 %v889
        %924 = vmatmul.f32.gmra.mxu0 %v900
        %v925 = vpop.f32.mrf.mxu0
        %v926 = vadd.f32 0.0, %v925
        %927 = vdwg.mxu0
        %928 = vmatpush.msra.mxu0 0.0
        %929 = vmatpush.msra.mxu0 0.0
        %930 = vmatpush.msra.mxu0 0.0
        %931 = vmatpush.msra.mxu0 0.0
        %932 = vmatpush.msra.mxu0 0.0
        %933 = vmatpush.msra.mxu0 0.0
        %934 = vmatpush.msra.mxu0 0.0
        %935 = vmatpush.msra.mxu0 0.0
        %936 = vmatpush.msra.mxu0 0.0
        %937 = vmatpush.msra.mxu0 0.0
        %938 = vmatpush.msra.mxu0 0.0
        %939 = vmatpush.msra.mxu0 %v906
        %940 = vmatpush.msra.mxu0 %v896
        %941 = vmatpush.msra.mxu0 %v894
        %942 = vmatpush.msra.mxu0 %v892
        %943 = vmatpush.msra.mxu0 %v890
        %944 = vmatmul.f32.gmra.mxu0 %v900
        %v945 = vpop.f32.mrf.mxu0
        %v946 = vadd.f32 0.0, %v945
        %947 = vdwg.mxu0
        %v948 = vld [vmem:[%s6] sm:$0xf]
        %950 = vset.pattern.permute.xlu0 0
        %951 = vperm.xlu0 %950, %v948
        %v952 = vpop.permute.xlu0 %951
        %v954 = vmul.f32 %v926, %v952
        %v955 = vmul.f32 %v946, %v952
        %v956 = vld [vmem:[%s7] sm:$0xf]
        %958 = vset.pattern.permute.xlu0 0
        %959 = vperm.xlu0 %958, %v956
        %v960 = vpop.permute.xlu0 %959
        %v962 = vadd.f32 %v954, %v960
        %v963 = vadd.f32 %v955, %v960
        %965 = vst [vmem:[#allocation1] ss:$2 sm:$0xff] %v344
        %v966 = vld.sshfl [vmem:[#allocation1] sm:$0xff pattern:$0x75316420]
        %v967 = vld.sshfl [vmem:[#allocation1 + $0x8] sm:$0xff pattern:$0x75316420]
        %v970 = vadd.f32 %v962, %v966
        %v971 = vadd.f32 %v963, %v967
        %v972 = vmax.f32 %v970, 0.0
        %v973 = vmax.f32 %v971, 0.0
        %v976 = vrot.slane %v973, 4
        %v977 = vsel %vm353, %v972, %v976
        %979 = vst [vmem:[%s338] sm:$0xff] %v977
        %s980 = sand.u32 %s207, 1
        %s981 = scalar_lea.sflag [#allocation6], %s980
        %s982 = sand.u32 %s207, 1
        %s983 = smul.addr %s982, 8
        %s984 = scalar_lea.vmem [#allocation9], %s983
        // Predicated region
        $region61: #{tpu_custom_call.1} parent=51 // pred_check
          %p985 = pneg %p217
        $region62: #{tpu_custom_call.1} parent=51 // pred_check_branch
          %987 = sbr.rel (%p985) target = $region64
        $region63: #{tpu_custom_call.1} parent=51 // pred_region
          %989 = vsyncadd %s981, 0
          %s990 = smul.addr %s26, 2
          %s991 = smul.addr %s990, 4
          %s992 = scalar_lea.hbm %s8, %s991
          %s994 = sshll.u32 %s984, 4
          %s995 = int_to_ptr.vmem [resolvable:$true] %s994
          %s996 = sshll.u32 %s992, 4
          %s997 = int_to_ptr.hbm [resolvable:$true] %s996
          %999 = dma.vmem_to_hbm [thread:$0]  %s995, 128, %s997, %s981
        $region64: #{tpu_custom_call.1} parent=51 // pred_fallthru
          _
      $region52: #{tpu_custom_call.1} parent=5 // pred_fallthru
        _
      %p1000 = scmp.le.s32.totalorder 2, %s21
      // Predicated region
      $region65: #{tpu_custom_call.1} parent=5 // pred_check
        %p1001 = pneg %p1000
      $region66: #{tpu_custom_call.1} parent=5 // pred_check_branch
        %1003 = sbr.rel (%p1001) target = $region68
      $region67: #{tpu_custom_call.1} parent=5 // pred_region
        %s1004 = ssub.s32 %s21, 2
        // Predicated region
        $region69: #{tpu_custom_call.1} parent=67 // pred_check
          %p1005 = pneg %p223
        $region70: #{tpu_custom_call.1} parent=67 // pred_check_branch
          %1007 = sbr.rel (%p1005) target = $region72
        $region71: #{tpu_custom_call.1} parent=67 // pred_region
          %s1008 = sand.u32 %s208, 1
          %s1009 = scalar_lea.sflag [#allocation6], %s1008
          %s1010 = sand.u32 %s208, 1
          %s1011 = smul.addr %s1010, 8
          %s1012 = scalar_lea.vmem [#allocation9], %s1011
          %1014 = dma.done %s1009, 128
        $region72: #{tpu_custom_call.1} parent=67 // pred_fallthru
          _
      $region68: #{tpu_custom_call.1} parent=5 // pred_fallthru
        _
    $region6: #{tpu_custom_call.1} parent=1 // loop_footer
      %s25 = sadd.s32 1, %s21
    $region7: #{tpu_custom_call.1} parent=1 // loop_footer_branch
      %20 = sbr.rel target = $region3
    $region8: #{tpu_custom_call.1} parent=1 // loop_exit
      _
    %1015 = vsyncpa [#allocation5], 1
    %s1016 = scalar_lea.sflag [#allocation5], 1
    %1017 = vsyncpa %s1016, 1
    %1018 = vsyncpa [#allocation8], 1
    %1019 = vsyncpa [#allocation6], 1
    %s1020 = scalar_lea.sflag [#allocation6], 1
    %1021 = vsyncpa %s1020, 1

</llo_original>
